<compile_context>
chip_gen: v7x
topology: tpu7x:2x2x1
jax: 0.10.0
libtpu: 0.0.40
codegen_flags: <defaults>
</compile_context>

<pallas_src>
import functools

import jax
import jax.numpy as jnp
from jax.experimental import pallas as pl
from jax.experimental.pallas import tpu as pltpu

EPS = 1e-6
_MIB = 1024 * 1024


def _round_up(a, b):
    return ((a + b - 1) // b) * b


def _round_down(a, b):
    return (a // b) * b


def _vmem_capacity_bytes():
    """Generation-aware VMEM capacity (128 MiB v5e/v6e, 64 MiB per-TC v7x)."""
    try:
        cap = int(getattr(pltpu.get_tpu_info(), "vmem_capacity_bytes", 0) or 0)
        if cap > 0:
            return cap
    except Exception:
        pass
    return 64 * _MIB  # conservative default (v7x per-core VMEM)


def _clamp_tm(tm, m_rows):
    """Row-tile size: multiple of 8, <= M, and >= 2 tiles when M allows it."""
    if m_rows <= 8:
        return m_rows                       # single block equal to the full dim
    tm = max(8, _round_down(tm, 8))
    tm = min(tm, _round_down(m_rows, 8))
    # Keep at least 2 row tiles so the "parallel" axis can be sharded across
    # both TensorCores on v7x (harmless extra grid step on 1-TC v5e/v6e).
    if m_rows >= 16 and pl.cdiv(m_rows, tm) < 2:
        tm = max(8, _round_down(pl.cdiv(m_rows, 2), 8))
    return tm


def _pick_resident_tm(m_rows, dp, x_item, out_item, limit_cap):
    # Per-row bytes: double-buffered x/out blocks + in-kernel temporaries
    # (f32 x copy, masked diff, bf16 normed, f32 MXU result).
    per_row = dp * (2 * x_item + 2 * out_item + 4 + 4 + 2 + 4)
    # W counted double-buffered: stays safe if the Buffered(1) hint is ignored.
    fixed = 2 * dp * dp * 2 + 2 * 3 * dp * 4
    avail = max(limit_cap - fixed, 8 * per_row)
    tm_cap = max(8, avail // per_row)
    tm_target = max(8, (3 * _MIB) // (dp * max(x_item, 4)))  # ~3 MiB x tile
    tm = _clamp_tm(min(2048, tm_target, tm_cap), m_rows)
    need = fixed + per_row * tm
    return tm, need


def _pick_streamed_tiles(m_rows, dp, x_item, out_item, limit_cap, tn_override):
    if tn_override is not None:
        tn = int(tn_override)
        assert tn % 128 == 0 and dp % tn == 0
    else:
        tn = 128                      # v5e MXU native width, always divides Dp
        for cand in (512, 256):       # fill the 2x256x256 MXU on v6e/v7x
            if dp % cand == 0:
                tn = cand
                break
    per_row = (2 * x_item * dp + 2 * out_item * tn
               + dp * (4 + 4 + 2) + tn * (4 + 4))
    fixed = 2 * dp * tn * 2 + 2 * (2 * dp + tn) * 4   # streamed W panels + params
    avail = max(limit_cap - fixed, 8 * per_row)
    tm_cap = max(8, avail // per_row)
    tm_target = max(8, (3 * _MIB) // (dp * max(x_item, 4)))
    tm = _clamp_tm(min(1024, tm_target, tm_cap), m_rows)
    need = fixed + per_row * tm
    return tm, tn, need


def _layernorm(x_f32, gamma, beta, *, d, padded, approx):
    """torch-style LayerNorm: two-pass unbiased variance, eps added to std."""
    d_f = float(d)
    denom = float(max(d - 1, 1))      # guard the degenerate D == 1 case
    mean = jnp.sum(x_f32, axis=-1, keepdims=True) * (1.0 / d_f)
    diff = x_f32 - mean
    if padded:
        # Zero padded lanes so they cannot perturb the variance.
        lane = jax.lax.broadcasted_iota(jnp.int32, x_f32.shape, x_f32.ndim - 1)
        diff = jnp.where(lane < d, diff, 0.0)
    var = jnp.sum(diff * diff, axis=-1, keepdims=True) * (1.0 / denom)
    std = jnp.sqrt(var)
    if approx:
        inv = pl.reciprocal(std + EPS, approx=True)   # EUP slot, ~1e-3 rel err
    else:
        inv = 1.0 / (std + EPS)
    return gamma * diff * inv + beta


def _resident_kernel(x_ref, gamma_ref, beta_ref, w_ref, bias_ref, o_ref, *,
                     d, padded, approx):
    x = x_ref[...].astype(jnp.float32)                            # (TM, Dp)
    normed = _layernorm(x, gamma_ref[...], beta_ref[...],
                        d=d, padded=padded, approx=approx)        # (TM, Dp)
    # sublayer = Linear(D, D) on the MXU: bf16 operands, f32 accumulate.
    y = jnp.dot(normed.astype(jnp.bfloat16), w_ref[...],
                preferred_element_type=jnp.float32)               # (TM, Dp)
    # dropout: eval mode -> identity; bias fused into the residual add.
    o_ref[...] = (x + bias_ref[...] + y).astype(o_ref.dtype)


def _streamed_kernel(x_ref, gamma_ref, beta_ref, w_ref, bias_ref, o_ref, *,
                     d, padded, approx, tn):
    j = pl.program_id(1)
    x = x_ref[...].astype(jnp.float32)                            # (TM, Dp)
    # LayerNorm is recomputed per N tile: cheap VPU work next to the MXU matmul
    # at the large D where this path is used.
    normed = _layernorm(x, gamma_ref[...], beta_ref[...],
                        d=d, padded=padded, approx=approx)
    y = jnp.dot(normed.astype(jnp.bfloat16), w_ref[...],
                preferred_element_type=jnp.float32)               # (TM, TN)
    col0 = pl.multiple_of(j * tn, tn)
    x_res = x_ref[:, pl.ds(col0, tn)].astype(jnp.float32)         # residual slice
    o_ref[...] = (x_res + bias_ref[...] + y).astype(o_ref.dtype)


def _run_resident(x2, gamma2, beta2, w2, bias2, *, tm, d, padded, approx,
                  vmem_limit, alias_input, single_buffer_consts):
    m_rows, dp = x2.shape
    const_kw = dict(pipeline_mode=pl.Buffered(1)) if single_buffer_consts else {}
    kernel = functools.partial(_resident_kernel, d=d, padded=padded, approx=approx)
    return pl.pallas_call(
        kernel,
        out_shape=jax.ShapeDtypeStruct((m_rows, dp), x2.dtype),
        grid=(pl.cdiv(m_rows, tm),),
        in_specs=[
            # TODO(synk): sweep pipeline_mode=pl.Buffered(3) on x for small D on v5e.
            pl.BlockSpec((tm, dp), lambda i: (i, 0)),              # x rows (pipelined)
            pl.BlockSpec((1, dp), lambda i: (0, 0), **const_kw),   # gamma (resident)
            pl.BlockSpec((1, dp), lambda i: (0, 0), **const_kw),   # beta  (resident)
            pl.BlockSpec((dp, dp), lambda i: (0, 0), **const_kw),  # W bf16 (resident)
            pl.BlockSpec((1, dp), lambda i: (0, 0), **const_kw),   # bias  (resident)
        ],
        out_specs=pl.BlockSpec((tm, dp), lambda i: (i, 0)),
        compiler_params=pltpu.CompilerParams(
            dimension_semantics=("parallel",),
            vmem_limit_bytes=vmem_limit),
        input_output_aliases={0: 0} if alias_input else {},
    )(x2, gamma2, beta2, w2, bias2)


def _run_streamed(x2, gamma2, beta2, w2, bias2, *, tm, tn, d, padded, approx,
                  vmem_limit, single_buffer_consts):
    m_rows, dp = x2.shape
    const_kw = dict(pipeline_mode=pl.Buffered(1)) if single_buffer_consts else {}
    kernel = functools.partial(_streamed_kernel, d=d, padded=padded,
                               approx=approx, tn=tn)
    return pl.pallas_call(
        kernel,
        out_shape=jax.ShapeDtypeStruct((m_rows, dp), x2.dtype),
        grid=(pl.cdiv(m_rows, tm), dp // tn),
        in_specs=[
            pl.BlockSpec((tm, dp), lambda i, j: (i, 0)),           # x rows
            pl.BlockSpec((1, dp), lambda i, j: (0, 0), **const_kw),
            pl.BlockSpec((1, dp), lambda i, j: (0, 0), **const_kw),
            pl.BlockSpec((dp, tn), lambda i, j: (0, j)),           # W panel (streamed)
            pl.BlockSpec((1, tn), lambda i, j: (0, j)),            # bias panel
        ],
        out_specs=pl.BlockSpec((tm, tn), lambda i, j: (i, j)),
        compiler_params=pltpu.CompilerParams(
            dimension_semantics=("parallel", "arbitrary"),
            vmem_limit_bytes=vmem_limit),
    )(x2, gamma2, beta2, w2, bias2)


def sublayer_connection(x, gamma, beta, w, bias, *, approx_recip=True,
                        force_streamed=False, tn_override=None):
    """out = x + Linear(LayerNorm(x)); dropout is eval-mode identity.

    x: [B, S, D]; gamma/beta/bias: [D]; w: [D, D]  (y = normed @ w + bias).
    """
    B, S, D = x.shape
    M = B * S
    Dp = _round_up(D, 128)
    padded = Dp != D
    x_item = jnp.dtype(x.dtype).itemsize
    out_item = x_item

    # ---- operands: no-copy fast path when D is already lane-aligned ----
    if padded:
        x2 = jnp.zeros((M, Dp), x.dtype).at[:, :D].set(x.reshape(M, D))
        gamma2 = jnp.zeros((1, Dp), jnp.float32).at[:, :D].set(
            gamma.astype(jnp.float32)[None, :])
        beta2 = jnp.zeros((1, Dp), jnp.float32).at[:, :D].set(
            beta.astype(jnp.float32)[None, :])
        bias2 = jnp.zeros((1, Dp), jnp.float32).at[:, :D].set(
            bias.astype(jnp.float32)[None, :])
        w2 = jnp.zeros((Dp, Dp), jnp.bfloat16).at[:D, :D].set(
            w.astype(jnp.bfloat16))
    else:
        x2 = x.reshape(M, D)
        gamma2 = gamma.astype(jnp.float32).reshape(1, D)
        beta2 = beta.astype(jnp.float32).reshape(1, D)
        bias2 = bias.astype(jnp.float32).reshape(1, D)
        w2 = w.astype(jnp.bfloat16)

    # ---- generation-aware VMEM budget ----
    vmem_cap = _vmem_capacity_bytes()
    limit_cap = min(int(vmem_cap * 0.8), 112 * _MIB)   # compiler-scratch headroom

    # Resident W counted double-buffered so the plan survives the Buffered(1)
    # fallback; switch to streamed-W when it no longer fits comfortably.
    w_worst = 2 * Dp * Dp * 2
    use_streamed = force_streamed or w_worst > int(0.7 * limit_cap)

    # x2 is a fresh temp in the padded path -> donate it to the output.
    alias_input = padded and not use_streamed

    if use_streamed:
        tm, tn, need = _pick_streamed_tiles(M, Dp, x_item, out_item, limit_cap,
                                            tn_override)
        vmem_limit = int(min(limit_cap, max(1.25 * need, 32 * _MIB)))
        run = functools.partial(
            _run_streamed, x2, gamma2, beta2, w2, bias2, tm=tm, tn=tn, d=D,
            padded=padded, approx=approx_recip, vmem_limit=vmem_limit)
    else:
        tm, need = _pick_resident_tm(M, Dp, x_item, out_item, limit_cap)
        vmem_limit = int(min(limit_cap, max(1.25 * need, 32 * _MIB)))
        run = functools.partial(
            _run_resident, x2, gamma2, beta2, w2, bias2, tm=tm, d=D,
            padded=padded, approx=approx_recip, vmem_limit=vmem_limit,
            alias_input=alias_input)

    try:
        out = run(single_buffer_consts=True)
    except Exception:
        # This jax/Mosaic build rejected pipeline_mode=pl.Buffered(1) on the
        # constant operands: retry with default double buffering (VMEM-only
        # cost; the budget above already assumed the worst case).
        out = run(single_buffer_consts=False)

    if padded:
        out = out[:, :D]
    return out.reshape(B, S, D)


def _reference(x, gamma, beta, w, bias):
    """Pure-JAX reference (torch.std semantics, bf16 MXU matmul)."""
    xf = x.astype(jnp.float32)
    d = xf.shape[-1]
    mean = jnp.mean(xf, axis=-1, keepdims=True)
    diff = xf - mean
    std = jnp.sqrt(jnp.sum(diff * diff, axis=-1, keepdims=True) / max(d - 1, 1))
    normed = gamma * diff / (std + EPS) + beta
    y = jnp.dot(normed.astype(jnp.bfloat16), w.astype(jnp.bfloat16),
                preferred_element_type=jnp.float32) + bias
    return (xf + y).astype(x.dtype)


if __name__ == "__main__":
    key = jax.random.PRNGKey(0)

    def make_inputs(k, B, S, D):
        kx, kw, kb, kg, kbe = jax.random.split(k, 5)
        x = jax.random.normal(kx, (B, S, D), dtype=jnp.float32)
        gamma = 1.0 + 0.1 * jax.random.normal(kg, (D,), dtype=jnp.float32)
        beta = 0.05 * jax.random.normal(kbe, (D,), dtype=jnp.float32)
        w = jax.random.normal(kw, (D, D), dtype=jnp.float32) / jnp.sqrt(D)
        bias = 0.01 * jax.random.normal(kb, (D,), dtype=jnp.float32)
        return x, gamma, beta, w, bias

    cases = [
        dict(B=2, S=8, D=32, kwargs={}),                       # lane-padded path
        dict(B=2, S=8, D=128, kwargs={}),                      # no-copy fast path
        dict(B=1, S=16, D=256,                                 # streamed-W path
             kwargs=dict(force_streamed=True, tn_override=128)),
    ]
    for case, k in zip(cases, jax.random.split(key, len(cases))):
        x, gamma, beta, w, bias = make_inputs(k, case["B"], case["S"], case["D"])
        out = jax.block_until_ready(
            sublayer_connection(x, gamma, beta, w, bias, **case["kwargs"]))
        ref = _reference(x, gamma, beta, w, bias)
        assert out.shape == x.shape
        err = float(jnp.max(jnp.abs(out - ref)))
        # bf16 MXU path + approx EUP reciprocal -> modest tolerance.
        assert jnp.allclose(out, ref, atol=2e-2, rtol=2e-2), (case, err)

    print("KERNEL_OK")
</pallas_src>

<mosaic_0001>
module attributes {stable_mosaic.version = 11 : i64} {
  func.func @_resident_kernel(%arg0: i32, %arg1: memref<8x128xf32, #tpu.memory_space<vmem>>, %arg2: memref<1x128xf32, #tpu.memory_space<vmem>>, %arg3: memref<1x128xf32, #tpu.memory_space<vmem>>, %arg4: memref<128x128xbf16, #tpu.memory_space<vmem>>, %arg5: memref<1x128xf32, #tpu.memory_space<vmem>>, %arg6: memref<8x128xf32, #tpu.memory_space<vmem>>) attributes {dimension_semantics = [#tpu.dimension_semantics<parallel>], iteration_bounds = array<i64: 2>, scalar_prefetch = 0 : i64, scratch_operands = 0 : i64, tpu.core_type = #tpu.core_type<tc>, window_params = [{transform_indices = @transform_0, window_bounds = array<i64: 8, 128>}, {pipeline_mode = #tpu.pipeline_mode<synchronous>, transform_indices = @transform_1, window_bounds = array<i64: 1, 128>}, {pipeline_mode = #tpu.pipeline_mode<synchronous>, transform_indices = @transform_2, window_bounds = array<i64: 1, 128>}, {pipeline_mode = #tpu.pipeline_mode<synchronous>, transform_indices = @transform_3, window_bounds = array<i64: 128, 128>}, {pipeline_mode = #tpu.pipeline_mode<synchronous>, transform_indices = @transform_4, window_bounds = array<i64: 1, 128>}, {transform_indices = @transform_5, window_bounds = array<i64: 8, 128>}]} {
    %c0 = arith.constant 0 : index
    %c0_0 = arith.constant 0 : index
    %0 = vector.load %arg1[%c0, %c0_0] : memref<8x128xf32, #tpu.memory_space<vmem>>, vector<8x128xf32>
    %c0_1 = arith.constant 0 : index
    %c0_2 = arith.constant 0 : index
    %1 = vector.load %arg2[%c0_1, %c0_2] : memref<1x128xf32, #tpu.memory_space<vmem>>, vector<1x128xf32>
    %c0_3 = arith.constant 0 : index
    %c0_4 = arith.constant 0 : index
    %2 = vector.load %arg3[%c0_3, %c0_4] : memref<1x128xf32, #tpu.memory_space<vmem>>, vector<1x128xf32>
    %cst = arith.constant dense<0.000000e+00> : vector<8xf32>
    %3 = vector.multi_reduction <add>, %0, %cst [1] : vector<8x128xf32> to vector<8xf32>
    %4 = vector.shape_cast %3 : vector<8xf32> to vector<8x1xf32>
    %cst_5 = arith.constant 3.125000e-02 : f32
    %5 = vector.broadcast %cst_5 : f32 to vector<8x1xf32>
    %6 = arith.mulf %4, %5 : vector<8x1xf32>
    %7 = vector.broadcast %6 : vector<8x1xf32> to vector<8x128xf32>
    %8 = arith.subf %0, %7 : vector<8x128xf32>
    %9 = tpu.iota {dimensions = array<i32: 1>} : vector<8x128xi32>
    %c32_i32 = arith.constant 32 : i32
    %10 = vector.broadcast %c32_i32 : i32 to vector<8x128xi32>
    %11 = arith.cmpi slt, %9, %10 : vector<8x128xi32>
    %cst_6 = arith.constant 0.000000e+00 : f32
    %12 = vector.broadcast %cst_6 : f32 to vector<8x128xf32>
    %13 = arith.select %11, %8, %12 : vector<8x128xi1>, vector<8x128xf32>
    %14 = arith.mulf %13, %13 : vector<8x128xf32>
    %cst_7 = arith.constant dense<0.000000e+00> : vector<8xf32>
    %15 = vector.multi_reduction <add>, %14, %cst_7 [1] : vector<8x128xf32> to vector<8xf32>
    %16 = vector.shape_cast %15 : vector<8xf32> to vector<8x1xf32>
    %cst_8 = arith.constant 0.0322580636 : f32
    %17 = vector.broadcast %cst_8 : f32 to vector<8x1xf32>
    %18 = arith.mulf %16, %17 : vector<8x1xf32>
    %19 = math.sqrt %18 : vector<8x1xf32>
    %cst_9 = arith.constant 9.99999997E-7 : f32
    %20 = vector.broadcast %cst_9 : f32 to vector<8x1xf32>
    %21 = arith.addf %19, %20 : vector<8x1xf32>
    %22 = tpu.reciprocal %21 {approx = true} : vector<8x1xf32> -> vector<8x1xf32>
    %23 = vector.broadcast %1 : vector<1x128xf32> to vector<8x128xf32>
    %24 = arith.mulf %23, %13 : vector<8x128xf32>
    %25 = vector.broadcast %22 : vector<8x1xf32> to vector<8x128xf32>
    %26 = arith.mulf %24, %25 : vector<8x128xf32>
    %27 = vector.broadcast %2 : vector<1x128xf32> to vector<8x128xf32>
    %28 = arith.addf %26, %27 : vector<8x128xf32>
    %29 = arith.truncf %28 : vector<8x128xf32> to vector<8x128xbf16>
    %c0_10 = arith.constant 0 : index
    %c0_11 = arith.constant 0 : index
    %30 = vector.load %arg4[%c0_10, %c0_11] : memref<128x128xbf16, #tpu.memory_space<vmem>>, vector<128x128xbf16>
    %cst_12 = arith.constant dense<0.000000e+00> : vector<8x128xf32>
    %31 = tpu.matmul %29, %30, %cst_12 {dimension_numbers = #tpu.dot_dimension_numbers<[1], [0], [0], [1], [0, 0, 1, 1], [], []>} : vector<8x128xbf16>, vector<128x128xbf16>, vector<8x128xf32> -> vector<8x128xf32>
    %c0_13 = arith.constant 0 : index
    %c0_14 = arith.constant 0 : index
    %32 = vector.load %arg5[%c0_13, %c0_14] : memref<1x128xf32, #tpu.memory_space<vmem>>, vector<1x128xf32>
    %33 = vector.broadcast %32 : vector<1x128xf32> to vector<8x128xf32>
    %34 = arith.addf %0, %33 : vector<8x128xf32>
    %35 = arith.addf %34, %31 : vector<8x128xf32>
    %c0_15 = arith.constant 0 : index
    %c0_16 = arith.constant 0 : index
    %36 = vector.load %arg6[%c0_15, %c0_16] : memref<8x128xf32, #tpu.memory_space<vmem>>, vector<8x128xf32>
    tpu.vector_store %arg6[%c0_15, %c0_16], %35 {strides = array<i32>} : memref<8x128xf32, #tpu.memory_space<vmem>>, vector<8x128xf32>,
    return
  }
  func.func @transform_0(%arg0: i32) -> (i32, i32) {
    %c0_i32 = arith.constant 0 : i32
    %c0_i32_0 = arith.constant 0 : i32
    return %arg0, %c0_i32 : i32, i32
  }
  func.func @transform_1(%arg0: i32) -> (i32, i32) {
    %c0_i32 = arith.constant 0 : i32
    %c0_i32_0 = arith.constant 0 : i32
    %c0_i32_1 = arith.constant 0 : i32
    return %c0_i32, %c0_i32_0 : i32, i32
  }
  func.func @transform_2(%arg0: i32) -> (i32, i32) {
    %c0_i32 = arith.constant 0 : i32
    %c0_i32_0 = arith.constant 0 : i32
    %c0_i32_1 = arith.constant 0 : i32
    return %c0_i32, %c0_i32_0 : i32, i32
  }
  func.func @transform_3(%arg0: i32) -> (i32, i32) {
    %c0_i32 = arith.constant 0 : i32
    %c0_i32_0 = arith.constant 0 : i32
    %c0_i32_1 = arith.constant 0 : i32
    return %c0_i32, %c0_i32_0 : i32, i32
  }
  func.func @transform_4(%arg0: i32) -> (i32, i32) {
    %c0_i32 = arith.constant 0 : i32
    %c0_i32_0 = arith.constant 0 : i32
    %c0_i32_1 = arith.constant 0 : i32
    return %c0_i32, %c0_i32_0 : i32, i32
  }
  func.func @transform_5(%arg0: i32) -> (i32, i32) {
    %c0_i32 = arith.constant 0 : i32
    %c0_i32_0 = arith.constant 0 : i32
    return %arg0, %c0_i32 : i32, i32
  }
}

module attributes {stable_mosaic.version = 11 : i64} {
  func.func @_resident_kernel(%arg0: i32, %arg1: memref<8x128xf32, #tpu.memory_space<vmem>>, %arg2: memref<1x128xf32, #tpu.memory_space<vmem>>, %arg3: memref<1x128xf32, #tpu.memory_space<vmem>>, %arg4: memref<128x128xbf16, #tpu.memory_space<vmem>>, %arg5: memref<1x128xf32, #tpu.memory_space<vmem>>, %arg6: memref<8x128xf32, #tpu.memory_space<vmem>>) attributes {dimension_semantics = [#tpu.dimension_semantics<parallel>], iteration_bounds = array<i64: 2>, scalar_prefetch = 0 : i64, scratch_operands = 0 : i64, tpu.core_type = #tpu.core_type<tc>, window_params = [{transform_indices = @transform_0, window_bounds = array<i64: 8, 128>}, {pipeline_mode = #tpu.pipeline_mode<synchronous>, transform_indices = @transform_1, window_bounds = array<i64: 1, 128>}, {pipeline_mode = #tpu.pipeline_mode<synchronous>, transform_indices = @transform_2, window_bounds = array<i64: 1, 128>}, {pipeline_mode = #tpu.pipeline_mode<synchronous>, transform_indices = @transform_3, window_bounds = array<i64: 128, 128>}, {pipeline_mode = #tpu.pipeline_mode<synchronous>, transform_indices = @transform_4, window_bounds = array<i64: 1, 128>}, {transform_indices = @transform_5, window_bounds = array<i64: 8, 128>}]} {
    %c0 = arith.constant 0 : index
    %c0_0 = arith.constant 0 : index
    %0 = vector.load %arg1[%c0, %c0_0] : memref<8x128xf32, #tpu.memory_space<vmem>>, vector<8x128xf32>
    %c0_1 = arith.constant 0 : index
    %c0_2 = arith.constant 0 : index
    %1 = vector.load %arg2[%c0_1, %c0_2] : memref<1x128xf32, #tpu.memory_space<vmem>>, vector<1x128xf32>
    %c0_3 = arith.constant 0 : index
    %c0_4 = arith.constant 0 : index
    %2 = vector.load %arg3[%c0_3, %c0_4] : memref<1x128xf32, #tpu.memory_space<vmem>>, vector<1x128xf32>
    %cst = arith.constant dense<0.000000e+00> : vector<8xf32>
    %3 = vector.multi_reduction <add>, %0, %cst [1] : vector<8x128xf32> to vector<8xf32>
    %4 = vector.shape_cast %3 : vector<8xf32> to vector<8x1xf32>
    %cst_5 = arith.constant 3.125000e-02 : f32
    %5 = vector.broadcast %cst_5 : f32 to vector<8x1xf32>
    %6 = arith.mulf %4, %5 : vector<8x1xf32>
    %7 = vector.broadcast %6 : vector<8x1xf32> to vector<8x128xf32>
    %8 = arith.subf %0, %7 : vector<8x128xf32>
    %9 = tpu.iota {dimensions = array<i32: 1>} : vector<8x128xi32>
    %c32_i32 = arith.constant 32 : i32
    %10 = vector.broadcast %c32_i32 : i32 to vector<8x128xi32>
    %11 = arith.cmpi slt, %9, %10 : vector<8x128xi32>
    %cst_6 = arith.constant 0.000000e+00 : f32
    %12 = vector.broadcast %cst_6 : f32 to vector<8x128xf32>
    %13 = arith.select %11, %8, %12 : vector<8x128xi1>, vector<8x128xf32>
    %14 = arith.mulf %13, %13 : vector<8x128xf32>
    %cst_7 = arith.constant dense<0.000000e+00> : vector<8xf32>
    %15 = vector.multi_reduction <add>, %14, %cst_7 [1] : vector<8x128xf32> to vector<8xf32>
    %16 = vector.shape_cast %15 : vector<8xf32> to vector<8x1xf32>
    %cst_8 = arith.constant 0.0322580636 : f32
    %17 = vector.broadcast %cst_8 : f32 to vector<8x1xf32>
    %18 = arith.mulf %16, %17 : vector<8x1xf32>
    %19 = math.sqrt %18 : vector<8x1xf32>
    %cst_9 = arith.constant 9.99999997E-7 : f32
    %20 = vector.broadcast %cst_9 : f32 to vector<8x1xf32>
    %21 = arith.addf %19, %20 : vector<8x1xf32>
    %22 = tpu.reciprocal %21 {approx = true} : vector<8x1xf32> -> vector<8x1xf32>
    %23 = vector.broadcast %1 : vector<1x128xf32> to vector<8x128xf32>
    %24 = arith.mulf %23, %13 : vector<8x128xf32>
    %25 = vector.broadcast %22 : vector<8x1xf32> to vector<8x128xf32>
    %26 = arith.mulf %24, %25 : vector<8x128xf32>
    %27 = vector.broadcast %2 : vector<1x128xf32> to vector<8x128xf32>
    %28 = arith.addf %26, %27 : vector<8x128xf32>
    %29 = arith.truncf %28 : vector<8x128xf32> to vector<8x128xbf16>
    %c0_10 = arith.constant 0 : index
    %c0_11 = arith.constant 0 : index
    %30 = vector.load %arg4[%c0_10, %c0_11] : memref<128x128xbf16, #tpu.memory_space<vmem>>, vector<128x128xbf16>
    %cst_12 = arith.constant dense<0.000000e+00> : vector<8x128xf32>
    %31 = tpu.matmul %29, %30, %cst_12 {dimension_numbers = #tpu.dot_dimension_numbers<[1], [0], [0], [1], [0, 0, 1, 1], [], []>} : vector<8x128xbf16>, vector<128x128xbf16>, vector<8x128xf32> -> vector<8x128xf32>
    %c0_13 = arith.constant 0 : index
    %c0_14 = arith.constant 0 : index
    %32 = vector.load %arg5[%c0_13, %c0_14] : memref<1x128xf32, #tpu.memory_space<vmem>>, vector<1x128xf32>
    %33 = vector.broadcast %32 : vector<1x128xf32> to vector<8x128xf32>
    %34 = arith.addf %0, %33 : vector<8x128xf32>
    %35 = arith.addf %34, %31 : vector<8x128xf32>
    %c0_15 = arith.constant 0 : index
    %c0_16 = arith.constant 0 : index
    %36 = vector.load %arg6[%c0_15, %c0_16] : memref<8x128xf32, #tpu.memory_space<vmem>>, vector<8x128xf32>
    tpu.vector_store %arg6[%c0_15, %c0_16], %35 {strides = array<i32>} : memref<8x128xf32, #tpu.memory_space<vmem>>, vector<8x128xf32>,
    return
  }
  func.func @transform_0(%arg0: i32) -> (i32, i32) {
    %c0_i32 = arith.constant 0 : i32
    %c0_i32_0 = arith.constant 0 : i32
    return %arg0, %c0_i32 : i32, i32
  }
  func.func @transform_1(%arg0: i32) -> (i32, i32) {
    %c0_i32 = arith.constant 0 : i32
    %c0_i32_0 = arith.constant 0 : i32
    %c0_i32_1 = arith.constant 0 : i32
    return %c0_i32, %c0_i32_0 : i32, i32
  }
  func.func @transform_2(%arg0: i32) -> (i32, i32) {
    %c0_i32 = arith.constant 0 : i32
    %c0_i32_0 = arith.constant 0 : i32
    %c0_i32_1 = arith.constant 0 : i32
    return %c0_i32, %c0_i32_0 : i32, i32
  }
  func.func @transform_3(%arg0: i32) -> (i32, i32) {
    %c0_i32 = arith.constant 0 : i32
    %c0_i32_0 = arith.constant 0 : i32
    %c0_i32_1 = arith.constant 0 : i32
    return %c0_i32, %c0_i32_0 : i32, i32
  }
  func.func @transform_4(%arg0: i32) -> (i32, i32) {
    %c0_i32 = arith.constant 0 : i32
    %c0_i32_0 = arith.constant 0 : i32
    %c0_i32_1 = arith.constant 0 : i32
    return %c0_i32, %c0_i32_0 : i32, i32
  }
  func.func @transform_5(%arg0: i32) -> (i32, i32) {
    %c0_i32 = arith.constant 0 : i32
    %c0_i32_0 = arith.constant 0 : i32
    return %arg0, %c0_i32 : i32, i32
  }
}

</mosaic_0001>

<llo_original>
// kernel: tpu_custom_call.1
$region0: #{tpu_custom_call.1}
  #allocation0 [shape = 'u32[]', space=smem, size = 0x4, offset = 0x4, fixed_abs, tag = 'smem constant byte address 0x4 - core index']
  #allocation1 [shape = 'u32[144,128]{1,0:T(1,128)}', space=vmem, size = 0x12000, scoped, tag = 'internal scratch']
  %s0 = inlined_call_operand.hbm [shape: f32[16,128], index: 0, kind: input, shape index: {}, may-alias: {0,5}]
  %s1 = inlined_call_operand.vmem [shape: f32[1,128], index: 1, kind: input, shape index: {}]
  %s2 = inlined_call_operand.vmem [shape: f32[1,128], index: 2, kind: input, shape index: {}]
  %s3 = inlined_call_operand.hbm [shape: bf16[128,128], index: 3, kind: input, shape index: {}]
  %s4 = inlined_call_operand.vmem [shape: f32[1,128], index: 4, kind: input, shape index: {}]
  %s5 = inlined_call_operand.hbm [shape: f32[16,128], index: 5, kind: output, shape index: {}, may-alias: {0,5}]
  %s6 = sld [smem:[#allocation0]]
  $region61: #{tpu_custom_call.1} parent=0
    _
  %s8 = ssub.s32 1, %s6
  %s9 = scalar_select 0, %s8, %s6
  $region1: #{tpu_custom_call.1} parent=0
    #allocation2 [shape = 'u8[8192]{0}', space=vmem, size = 0x2000, scoped, tag = 'input window, operand 0']
    #allocation3 [shape = 's32[2]{0}', space=sflag, size = 0x8, scoped, tag = 'scoped memory for tpu_custom_call.1']
    #allocation4 [shape = 's32[2]{0}', space=sflag, size = 0x8, scoped, tag = 'scoped memory for tpu_custom_call.1']
    #allocation5 [shape = 'u8[32768]{0}', space=vmem, size = 0x8000, scoped, tag = 'input window, operand 3, single buffered']
    #allocation6 [shape = 's32[1]{0}', space=sflag, size = 0x4, scoped, tag = 'scoped memory for tpu_custom_call.1']
    #allocation7 [shape = 'u8[8192]{0}', space=vmem, size = 0x2000, scoped, tag = 'output window, operand 0']
    %10 = vsyncpa [#allocation3], 0
    %s11 = scalar_lea.sflag [#allocation3], 1
    %12 = vsyncpa %s11, 0
    %13 = vsyncpa [#allocation6], 0
    %14 = vsyncpa [#allocation4], 0
    %s15 = scalar_lea.sflag [#allocation4], 1
    %16 = vsyncpa %s15, 0
    loop: start=0, step=1, limit=4
    $region2: #{tpu_custom_call.1} parent=1 // loop_pre_header
      _
    $region3: #{tpu_custom_call.1} parent=1 // loop_header
      %s18 = sphi 0, %s22
      %p19 = scmp.ge.s32.totalorder %s18, 4
      %s28 = sphi 0, %s30
      %s31 = sphi 0, %s28
      %s32 = sphi 0, %s31
      %s48 = sphi 0, %s32
      %s52 = sphi 0, %s52
      %s54 = sphi 0, %s52
      %s55 = sphi 0, %s54
      %s69 = sphi 0, %s55
      %s73 = sphi 0, %s73
      %s75 = sphi 0, %s73
      %s76 = sphi 0, %s75
      %s90 = sphi 0, %s76
      %s94 = sphi 0, %s94
      %s96 = sphi 0, %s94
      %s97 = sphi 0, %s96
      %s111 = sphi 0, %s97
      %s115 = sphi 0, %s115
      %s117 = sphi 0, %s115
      %s118 = sphi 0, %s117
      %s132 = sphi 0, %s118
      %s138 = sphi 0, %s140
      %s141 = sphi 0, %s138
      %s142 = sphi 0, %s141
      %s158 = sphi 0, %s142
    $region4: #{tpu_custom_call.1} parent=1 // loop_header_branch
      %21 = sbr.rel (%p19) target = $region8
    $region5: #{tpu_custom_call.1} parent=1 // loop_body
      %s23 = ssub.s32 %s18, 1
      %s24 = ssub.s32 %s18, 2
      %s25 = sadd.s32 %s18, 1
      %s26 = ssub.s32 %s18, %s25
      %p27 = scmp.eq.s32.totalorder %s26, 0
      %s29 = sadd.s32 %s28, 1
      %s30 = scalar_select %p27, %s28, %s29
      %p33 = pneg %p27
      %p34 = scmp.eq.s32.totalorder %s18, 1
      %p35 = por %p33, %p34
      %p36 = scmp.ne.s32.totalorder %s28, %s31
      %p37 = scmp.eq.s32.totalorder %s18, 0
      %p38 = por %p36, %p37
      %p39 = scmp.ne.s32.totalorder %s28, %s31
      %p40 = scmp.eq.s32.totalorder %s23, 1
      %p41 = por %p39, %p40
      %p42 = scmp.ne.s32.totalorder %s31, %s32
      %p43 = scmp.eq.s32.totalorder %s23, 0
      %p44 = por %p42, %p43
      %p45 = scmp.ne.s32.totalorder %s31, %s32
      %p46 = scmp.eq.s32.totalorder %s24, 1
      %p47 = por %p45, %p46
      %p49 = scmp.ne.s32.totalorder %s32, %s48
      %p50 = scmp.eq.s32.totalorder %s24, 0
      %p51 = por %p49, %p50
      %s53 = sadd.s32 %s52, 1
      %p56 = scmp.eq.s32.totalorder %s18, 1
      %p57 = scmp.ne.s32.totalorder %s52, %s54
      %p58 = scmp.eq.s32.totalorder %s18, 0
      %p59 = por %p57, %p58
      %p60 = scmp.ne.s32.totalorder %s52, %s54
      %p61 = scmp.eq.s32.totalorder %s23, 1
      %p62 = por %p60, %p61
      %p63 = scmp.ne.s32.totalorder %s54, %s55
      %p64 = scmp.eq.s32.totalorder %s23, 0
      %p65 = por %p63, %p64
      %p66 = scmp.ne.s32.totalorder %s54, %s55
      %p67 = scmp.eq.s32.totalorder %s24, 1
      %p68 = por %p66, %p67
      %p70 = scmp.ne.s32.totalorder %s55, %s69
      %p71 = scmp.eq.s32.totalorder %s24, 0
      %p72 = por %p70, %p71
      %s74 = sadd.s32 %s73, 1
      %p77 = scmp.eq.s32.totalorder %s18, 1
      %p78 = scmp.ne.s32.totalorder %s73, %s75
      %p79 = scmp.eq.s32.totalorder %s18, 0
      %p80 = por %p78, %p79
      %p81 = scmp.ne.s32.totalorder %s73, %s75
      %p82 = scmp.eq.s32.totalorder %s23, 1
      %p83 = por %p81, %p82
      %p84 = scmp.ne.s32.totalorder %s75, %s76
      %p85 = scmp.eq.s32.totalorder %s23, 0
      %p86 = por %p84, %p85
      %p87 = scmp.ne.s32.totalorder %s75, %s76
      %p88 = scmp.eq.s32.totalorder %s24, 1
      %p89 = por %p87, %p88
      %p91 = scmp.ne.s32.totalorder %s76, %s90
      %p92 = scmp.eq.s32.totalorder %s24, 0
      %p93 = por %p91, %p92
      %s95 = sadd.s32 %s94, 1
      %p98 = scmp.eq.s32.totalorder %s18, 1
      %p99 = scmp.ne.s32.totalorder %s94, %s96
      %p100 = scmp.eq.s32.totalorder %s18, 0
      %p101 = por %p99, %p100
      %p102 = scmp.ne.s32.totalorder %s94, %s96
      %p103 = scmp.eq.s32.totalorder %s23, 1
      %p104 = por %p102, %p103
      %p105 = scmp.ne.s32.totalorder %s96, %s97
      %p106 = scmp.eq.s32.totalorder %s23, 0
      %p107 = por %p105, %p106
      %p108 = scmp.ne.s32.totalorder %s96, %s97
      %p109 = scmp.eq.s32.totalorder %s24, 1
      %p110 = por %p108, %p109
      %p112 = scmp.ne.s32.totalorder %s97, %s111
      %p113 = scmp.eq.s32.totalorder %s24, 0
      %p114 = por %p112, %p113
      %s116 = sadd.s32 %s115, 1
      %p119 = scmp.eq.s32.totalorder %s18, 1
      %p120 = scmp.ne.s32.totalorder %s115, %s117
      %p121 = scmp.eq.s32.totalorder %s18, 0
      %p122 = por %p120, %p121
      %p123 = scmp.ne.s32.totalorder %s115, %s117
      %p124 = scmp.eq.s32.totalorder %s23, 1
      %p125 = por %p123, %p124
      %p126 = scmp.ne.s32.totalorder %s117, %s118
      %p127 = scmp.eq.s32.totalorder %s23, 0
      %p128 = por %p126, %p127
      %p129 = scmp.ne.s32.totalorder %s117, %s118
      %p130 = scmp.eq.s32.totalorder %s24, 1
      %p131 = por %p129, %p130
      %p133 = scmp.ne.s32.totalorder %s118, %s132
      %p134 = scmp.eq.s32.totalorder %s24, 0
      %p135 = por %p133, %p134
      %s136 = ssub.s32 %s18, %s25
      %p137 = scmp.eq.s32.totalorder %s136, 0
      %s139 = sadd.s32 %s138, 1
      %s140 = scalar_select %p137, %s138, %s139
      %p143 = pneg %p137
      %p144 = scmp.eq.s32.totalorder %s18, 1
      %p145 = por %p143, %p144
      %p146 = scmp.ne.s32.totalorder %s138, %s141
      %p147 = scmp.eq.s32.totalorder %s18, 0
      %p148 = por %p146, %p147
      %p149 = scmp.ne.s32.totalorder %s138, %s141
      %p150 = scmp.eq.s32.totalorder %s23, 1
      %p151 = por %p149, %p150
      %p152 = scmp.ne.s32.totalorder %s141, %s142
      %p153 = scmp.eq.s32.totalorder %s23, 0
      %p154 = por %p152, %p153
      %p155 = scmp.ne.s32.totalorder %s141, %s142
      %p156 = scmp.eq.s32.totalorder %s24, 1
      %p157 = por %p155, %p156
      %p159 = scmp.ne.s32.totalorder %s142, %s158
      %p160 = scmp.eq.s32.totalorder %s24, 0
      %p161 = por %p159, %p160
      %p162 = scmp.le.s32.totalorder 1, %s18
      %p163 = scmp.lt.s32.totalorder %s18, 3
      %p164 = pnand %p162, %p163
      %p165 = pneg %p164
      // Predicated region
      $region9: #{tpu_custom_call.1} parent=5 // pred_check
        _
      $region10: #{tpu_custom_call.1} parent=5 // pred_check_branch
        %167 = sbr.rel (%p164) target = $region12
      $region11: #{tpu_custom_call.1} parent=5 // pred_region
        %s168 = ssub.s32 %s18, 1
        // Predicated region
        $region13: #{tpu_custom_call.1} parent=11 // pred_check
          %p169 = pneg %p65
        $region14: #{tpu_custom_call.1} parent=11 // pred_check_branch
          %171 = sbr.rel (%p169) target = $region16
        $region15: #{tpu_custom_call.1} parent=11 // pred_region
          _
        $region16: #{tpu_custom_call.1} parent=11 // pred_fallthru
          _
        // Predicated region
        $region17: #{tpu_custom_call.1} parent=11 // pred_check
          %p172 = pneg %p86
        $region18: #{tpu_custom_call.1} parent=11 // pred_check_branch
          %174 = sbr.rel (%p172) target = $region20
        $region19: #{tpu_custom_call.1} parent=11 // pred_region
          _
        $region20: #{tpu_custom_call.1} parent=11 // pred_fallthru
          _
        // Predicated region
        $region21: #{tpu_custom_call.1} parent=11 // pred_check
          %p175 = pneg %p107
        $region22: #{tpu_custom_call.1} parent=11 // pred_check_branch
          %177 = sbr.rel (%p175) target = $region24
        $region23: #{tpu_custom_call.1} parent=11 // pred_region
          %s179 = ssub.s32 1024, 1024
          %180 = vsyncadd [#allocation6], %s179
          %s181 = sshll.u32 [#allocation5], 4
          %s182 = int_to_ptr.vmem [resolvable:$true] %s181
          %187 = dma.hbm_to_vmem [thread:$0]  %s3, 1024, %s182, [#allocation6], 64, 64, 4
        $region24: #{tpu_custom_call.1} parent=11 // pred_fallthru
          _
        // Predicated region
        $region25: #{tpu_custom_call.1} parent=11 // pred_check
          %p188 = pneg %p128
        $region26: #{tpu_custom_call.1} parent=11 // pred_check_branch
          %190 = sbr.rel (%p188) target = $region28
        $region27: #{tpu_custom_call.1} parent=11 // pred_region
          _
        $region28: #{tpu_custom_call.1} parent=11 // pred_fallthru
          _
      $region12: #{tpu_custom_call.1} parent=5 // pred_fallthru
        _
      %p191 = scmp.lt.s32.totalorder %s18, 2
      // Predicated region
      $region29: #{tpu_custom_call.1} parent=5 // pred_check
        %p192 = pneg %p191
      $region30: #{tpu_custom_call.1} parent=5 // pred_check_branch
        %194 = sbr.rel (%p192) target = $region32
      $region31: #{tpu_custom_call.1} parent=5 // pred_region
        // Predicated region
        $region33: #{tpu_custom_call.1} parent=31 // pred_check
          %p195 = pneg %p38
        $region34: #{tpu_custom_call.1} parent=31 // pred_check_branch
          %197 = sbr.rel (%p195) target = $region36
        $region35: #{tpu_custom_call.1} parent=31 // pred_region
          %s198 = sand.u32 %s28, 1
          %s199 = scalar_lea.sflag [#allocation3], %s198
          %s200 = sand.u32 %s28, 1
          %s201 = smul.addr %s200, 8
          %s202 = scalar_lea.vmem [#allocation2], %s201
          %s204 = ssub.s32 128, 128
          %205 = vsyncadd %s199, %s204
          %s206 = smul.addr %s18, 128
          %s207 = scalar_lea.hbm %s0, %s206
          %s209 = sshll.u32 %s202, 4
          %s210 = int_to_ptr.vmem [resolvable:$true] %s209
          %212 = dma.hbm_to_vmem [thread:$0]  %s207, 128, %s210, %s199
        $region36: #{tpu_custom_call.1} parent=31 // pred_fallthru
          _
      $region32: #{tpu_custom_call.1} parent=5 // pred_fallthru
        _
      %p213 = scmp.le.s32.totalorder 1, %s18
      %p214 = scmp.lt.s32.totalorder %s18, 3
      %p215 = pnand %p213, %p214
      %p216 = pneg %p215
      // Predicated region
      $region37: #{tpu_custom_call.1} parent=5 // pred_check
        _
      $region38: #{tpu_custom_call.1} parent=5 // pred_check_branch
        %218 = sbr.rel (%p215) target = $region40
      $region39: #{tpu_custom_call.1} parent=5 // pred_region
        %s219 = ssub.s32 %s18, 1
        %s220 = sand.u32 %s31, 1
        %s221 = scalar_lea.sflag [#allocation3], %s220
        %s222 = sand.u32 %s31, 1
        %s223 = smul.addr %s222, 8
        %s224 = scalar_lea.vmem [#allocation2], %s223
        // Predicated region
        $region41: #{tpu_custom_call.1} parent=39 // pred_check
          %p225 = pneg %p44
        $region42: #{tpu_custom_call.1} parent=39 // pred_check_branch
          %227 = sbr.rel (%p225) target = $region44
        $region43: #{tpu_custom_call.1} parent=39 // pred_region
          %228 = dma.done %s221, 128
        $region44: #{tpu_custom_call.1} parent=39 // pred_fallthru
          _
        // Predicated region
        $region45: #{tpu_custom_call.1} parent=39 // pred_check
          %p229 = pneg %p107
        $region46: #{tpu_custom_call.1} parent=39 // pred_check_branch
          %231 = sbr.rel (%p229) target = $region48
        $region47: #{tpu_custom_call.1} parent=39 // pred_region
          %232 = dma.done [#allocation6], 1024
        $region48: #{tpu_custom_call.1} parent=39 // pred_fallthru
          _
        %s233 = sand.u32 %s31, 1
        %s234 = scalar_lea.sflag [#allocation3], %s233
        %s235 = sand.u32 %s31, 1
        %s236 = smul.addr %s235, 8
        %s237 = scalar_lea.vmem [#allocation2], %s236
        %p238 = pneg %p44
        %p239 = pneg %p41
        %p240 = pneg %p65
        %p241 = pneg %p62
        %p242 = pneg %p86
        %p243 = pneg %p83
        %p244 = pneg %p107
        %p245 = pneg %p104
        %p246 = pneg %p128
        %p247 = pneg %p125
        %p248 = pneg %p154
        %p249 = pneg %p151
        %s250 = sand.u32 %s141, 1
        %s251 = scalar_lea.sflag [#allocation4], %s250
        %s252 = sand.u32 %s141, 1
        %s253 = smul.addr %s252, 8
        %s254 = scalar_lea.vmem [#allocation7], %s253
        %v256 = vld [vmem:[%s224] sm:$0xff]
        %v257 = vld [vmem:[%s1] sm:$0x1]
        %v258 = vld [vmem:[%s2] sm:$0x1]
        %259 = vadd.xlane.f32.xlu0 %v256
        %v260 = vpop.xlane.xlu0 %259
        %v261 = vmul.f32 %v260, 0.03125
        %v262 = vsub.f32 %v256, %v261
        %v263 = vlaneseq
        %v264 = vand.u32 %v263, 127
        %vm265 = vcmp.lt.s32.totalorder %v264, 32
        %v266 = vsel %vm265, %v262, 0.0
        %v267 = vmul.f32 %v266, %v266
        %268 = vadd.xlane.f32.xlu0 %v267
        %v269 = vpop.xlane.xlu0 %268
        %v270 = vmul.f32 %v269, 0.032258064
        %v271 = vrsqrt.pop %v270
        %v272 = vmul.f32 %v270, %v271
        %vm273 = vcmp.eq.f32.partialorder %v270, inf
        %v274 = vsel %vm273, %v270, %v272
        %vm275 = vcmp.eq.f32.partialorder %v270, 0.0
        %v276 = vand.u32 %v270, 2147483648
        %v277 = vsel %vm275, %v276, %v274
        %v278 = vadd.f32 %v277, 1e-06
        %v279 = vrcp.pop %v278
        %v281 = vlaneseq
        %v282 = vshrl.u32 %v281, 7
        %v283 = vsub.s32 0, %v282
        %v284 = vrot.slane %v257, %v283
        %v286 = vmul.f32 %v284, %v266
        %v287 = vmul.f32 %v286, %v279
        %v289 = vlaneseq
        %v290 = vshrl.u32 %v289, 7
        %v291 = vsub.s32 0, %v290
        %v292 = vrot.slane %v258, %v291
        %v294 = vadd.f32 %v287, %v292
        %v295 = vpack.c.bf16 %v294, %v294
        %v296 = vld [vmem:[#allocation5] sm:$0xf]
        %v297 = vld [vmem:[#allocation5 + $0x4] sm:$0xf]
        %v298 = vld [vmem:[#allocation5 + $0x8] sm:$0xf]
        %v299 = vld [vmem:[#allocation5 + $0xc] sm:$0xf]
        %v300 = vld [vmem:[#allocation5 + $0x10] sm:$0xf]
        %v301 = vld [vmem:[#allocation5 + $0x14] sm:$0xf]
        %v302 = vld [vmem:[#allocation5 + $0x18] sm:$0xf]
        %v303 = vld [vmem:[#allocation5 + $0x1c] sm:$0xf]
        %v304 = vld [vmem:[#allocation5 + $0x20] sm:$0xf]
        %v305 = vld [vmem:[#allocation5 + $0x24] sm:$0xf]
        %v306 = vld [vmem:[#allocation5 + $0x28] sm:$0xf]
        %v307 = vld [vmem:[#allocation5 + $0x2c] sm:$0xf]
        %v308 = vld [vmem:[#allocation5 + $0x30] sm:$0xf]
        %v309 = vld [vmem:[#allocation5 + $0x34] sm:$0xf]
        %v310 = vld [vmem:[#allocation5 + $0x38] sm:$0xf]
        %v311 = vld [vmem:[#allocation5 + $0x3c] sm:$0xf]
        %v328 = vunpack.c.l.b16 %v296
        %v329 = vunpack.c.l.b16 %v297
        %v330 = vunpack.c.l.b16 %v298
        %v331 = vunpack.c.l.b16 %v299
        %v332 = vunpack.c.l.b16 %v300
        %v333 = vunpack.c.l.b16 %v301
        %v334 = vunpack.c.l.b16 %v302
        %v335 = vunpack.c.l.b16 %v303
        %v336 = vunpack.c.l.b16 %v304
        %v337 = vunpack.c.l.b16 %v305
        %v338 = vunpack.c.l.b16 %v306
        %v339 = vunpack.c.l.b16 %v307
        %v340 = vunpack.c.l.b16 %v308
        %v341 = vunpack.c.l.b16 %v309
        %v342 = vunpack.c.l.b16 %v310
        %v343 = vunpack.c.l.b16 %v311
        %v344 = vpack.c.b16 %v329, %v328
        %v345 = vpack.c.b16 %v331, %v330
        %v346 = vpack.c.b16 %v333, %v332
        %v347 = vpack.c.b16 %v335, %v334
        %v348 = vpack.c.b16 %v337, %v336
        %v349 = vpack.c.b16 %v339, %v338
        %v350 = vpack.c.b16 %v341, %v340
        %v351 = vpack.c.b16 %v343, %v342
        %360 = vmatprep.subr.bf16.mxu0 0
        %361 = vmatpush1.bf16.msra.mxu0 %v344
        %362 = vmatprep.subr.bf16.mxu0 0
        %363 = vmatpush1.bf16.msra.mxu0 %v345
        %364 = vmatprep.subr.bf16.mxu0 0
        %365 = vmatpush1.bf16.msra.mxu0 %v346
        %366 = vmatprep.subr.bf16.mxu0 0
        %367 = vmatpush1.bf16.msra.mxu0 %v347
        %368 = vmatprep.subr.bf16.mxu0 0
        %369 = vmatpush1.bf16.msra.mxu0 %v348
        %370 = vmatprep.subr.bf16.mxu0 0
        %371 = vmatpush1.bf16.msra.mxu0 %v349
        %372 = vmatprep.subr.bf16.mxu0 0
        %373 = vmatpush1.bf16.msra.mxu0 %v350
        %374 = vmatprep.subr.bf16.mxu0 0
        %375 = vmatpush1.bf16.msra.mxu0 %v351
        %376 = vmatprep.subr.bf16.mxu0 0
        %377 = vmatpush1.bf16.msra.mxu0 0
        %378 = vmatprep.subr.bf16.mxu0 0
        %379 = vmatpush1.bf16.msra.mxu0 0
        %380 = vmatprep.subr.bf16.mxu0 0
        %381 = vmatpush1.bf16.msra.mxu0 0
        %382 = vmatprep.subr.bf16.mxu0 0
        %383 = vmatpush1.bf16.msra.mxu0 0
        %384 = vmatprep.subr.bf16.mxu0 0
        %385 = vmatpush1.bf16.msra.mxu0 0
        %386 = vmatprep.subr.bf16.mxu0 0
        %387 = vmatpush1.bf16.msra.mxu0 0
        %388 = vmatprep.subr.bf16.mxu0 0
        %389 = vmatpush1.bf16.msra.mxu0 0
        %390 = vmatprep.subr.bf16.mxu0 0
        %391 = vmatpush1.bf16.msra.mxu0 0
        %392 = vmatprep.mubr.bf16.mxu0 0
        %393 = vmatmul.mubr.bf16.gmra.mrb[0].mxu0 %v295
        %v394 = vpop.f32.mrb[0].mxu0
        %v395 = vadd.f32 0.0, %v394
        %v396 = vpop.f32.mrb[0].mxu0
        %v397 = vpop.f32.mrb[0].mxu0
        %v398 = vpop.f32.mrb[0].mxu0
        %399 = vdwg.mxu0
        %v400 = vld [vmem:[%s4] sm:$0x1]
        %v402 = vlaneseq
        %v403 = vshrl.u32 %v402, 7
        %v404 = vsub.s32 0, %v403
        %v405 = vrot.slane %v400, %v404
        %v407 = vadd.f32 %v256, %v405
        %v408 = vadd.f32 %v407, %v395
        %409 = vst [vmem:[%s254] sm:$0xff] %v408
        %s410 = sand.u32 %s141, 1
        %s411 = scalar_lea.sflag [#allocation4], %s410
        %s412 = sand.u32 %s141, 1
        %s413 = smul.addr %s412, 8
        %s414 = scalar_lea.vmem [#allocation7], %s413
        // Predicated region
        $region49: #{tpu_custom_call.1} parent=39 // pred_check
          %p415 = pneg %p151
        $region50: #{tpu_custom_call.1} parent=39 // pred_check_branch
          %417 = sbr.rel (%p415) target = $region52
        $region51: #{tpu_custom_call.1} parent=39 // pred_region
          %s419 = ssub.s32 128, 128
          %420 = vsyncadd %s411, %s419
          %s421 = smul.addr %s23, 128
          %s422 = scalar_lea.hbm %s5, %s421
          %s424 = sshll.u32 %s414, 4
          %s425 = int_to_ptr.vmem [resolvable:$true] %s424
          %427 = dma.vmem_to_hbm [thread:$0]  %s425, 128, %s422, %s411
        $region52: #{tpu_custom_call.1} parent=39 // pred_fallthru
          _
      $region40: #{tpu_custom_call.1} parent=5 // pred_fallthru
        _
      %p428 = scmp.le.s32.totalorder 2, %s18
      // Predicated region
      $region53: #{tpu_custom_call.1} parent=5 // pred_check
        %p429 = pneg %p428
      $region54: #{tpu_custom_call.1} parent=5 // pred_check_branch
        %431 = sbr.rel (%p429) target = $region56
      $region55: #{tpu_custom_call.1} parent=5 // pred_region
        %s432 = ssub.s32 %s18, 2
        // Predicated region
        $region57: #{tpu_custom_call.1} parent=55 // pred_check
          %p433 = pneg %p157
        $region58: #{tpu_custom_call.1} parent=55 // pred_check_branch
          %435 = sbr.rel (%p433) target = $region60
        $region59: #{tpu_custom_call.1} parent=55 // pred_region
          %s436 = sand.u32 %s142, 1
          %s437 = scalar_lea.sflag [#allocation4], %s436
          %s438 = sand.u32 %s142, 1
          %s439 = smul.addr %s438, 8
          %s440 = scalar_lea.vmem [#allocation7], %s439
          %441 = dma.done %s437, 128
        $region60: #{tpu_custom_call.1} parent=55 // pred_fallthru
          _
      $region56: #{tpu_custom_call.1} parent=5 // pred_fallthru
        _
    $region6: #{tpu_custom_call.1} parent=1 // loop_footer
      %s22 = sadd.s32 1, %s18
    $region7: #{tpu_custom_call.1} parent=1 // loop_footer_branch
      %17 = sbr.rel target = $region3
    $region8: #{tpu_custom_call.1} parent=1 // loop_exit
      _
    %442 = vsyncpa [#allocation3], 1
    %s443 = scalar_lea.sflag [#allocation3], 1
    %444 = vsyncpa %s443, 1
    %445 = vsyncpa [#allocation6], 1
    %446 = vsyncpa [#allocation4], 1
    %s447 = scalar_lea.sflag [#allocation4], 1
    %448 = vsyncpa %s447, 1

// kernel: tpu_custom_call.1
$region0: #{tpu_custom_call.1}
  #allocation0 [shape = 'u32[]', space=smem, size = 0x4, offset = 0x4, fixed_abs, tag = 'smem constant byte address 0x4 - core index']
  #allocation1 [shape = 'u32[144,128]{1,0:T(1,128)}', space=vmem, size = 0x12000, scoped, tag = 'internal scratch']
  %s0 = inlined_call_operand.hbm [shape: f32[16,128], index: 0, kind: input, shape index: {}, may-alias: {0,5}]
  %s1 = inlined_call_operand.vmem [shape: f32[1,128], index: 1, kind: input, shape index: {}]
  %s2 = inlined_call_operand.vmem [shape: f32[1,128], index: 2, kind: input, shape index: {}]
  %s3 = inlined_call_operand.hbm [shape: bf16[128,128], index: 3, kind: input, shape index: {}]
  %s4 = inlined_call_operand.vmem [shape: f32[1,128], index: 4, kind: input, shape index: {}]
  %s5 = inlined_call_operand.hbm [shape: f32[16,128], index: 5, kind: output, shape index: {}, may-alias: {0,5}]
  %s6 = sld [smem:[#allocation0]]
  $region61: #{tpu_custom_call.1} parent=0
    _
  %s8 = ssub.s32 1, %s6
  %s9 = scalar_select 0, %s8, %s6
  $region1: #{tpu_custom_call.1} parent=0
    #allocation2 [shape = 'u8[8192]{0}', space=vmem, size = 0x2000, scoped, tag = 'input window, operand 0']
    #allocation3 [shape = 's32[2]{0}', space=sflag, size = 0x8, scoped, tag = 'scoped memory for tpu_custom_call.1']
    #allocation4 [shape = 's32[2]{0}', space=sflag, size = 0x8, scoped, tag = 'scoped memory for tpu_custom_call.1']
    #allocation5 [shape = 'u8[32768]{0}', space=vmem, size = 0x8000, scoped, tag = 'input window, operand 3, single buffered']
    #allocation6 [shape = 's32[1]{0}', space=sflag, size = 0x4, scoped, tag = 'scoped memory for tpu_custom_call.1']
    #allocation7 [shape = 'u8[8192]{0}', space=vmem, size = 0x2000, scoped, tag = 'output window, operand 0']
    %10 = vsyncpa [#allocation3], 0
    %s11 = scalar_lea.sflag [#allocation3], 1
    %12 = vsyncpa %s11, 0
    %13 = vsyncpa [#allocation6], 0
    %14 = vsyncpa [#allocation4], 0
    %s15 = scalar_lea.sflag [#allocation4], 1
    %16 = vsyncpa %s15, 0
    loop: start=0, step=1, limit=4
    $region2: #{tpu_custom_call.1} parent=1 // loop_pre_header
      _
    $region3: #{tpu_custom_call.1} parent=1 // loop_header
      %s18 = sphi 0, %s22
      %p19 = scmp.ge.s32.totalorder %s18, 4
      %s28 = sphi 0, %s30
      %s31 = sphi 0, %s28
      %s32 = sphi 0, %s31
      %s48 = sphi 0, %s32
      %s52 = sphi 0, %s52
      %s54 = sphi 0, %s52
      %s55 = sphi 0, %s54
      %s69 = sphi 0, %s55
      %s73 = sphi 0, %s73
      %s75 = sphi 0, %s73
      %s76 = sphi 0, %s75
      %s90 = sphi 0, %s76
      %s94 = sphi 0, %s94
      %s96 = sphi 0, %s94
      %s97 = sphi 0, %s96
      %s111 = sphi 0, %s97
      %s115 = sphi 0, %s115
      %s117 = sphi 0, %s115
      %s118 = sphi 0, %s117
      %s132 = sphi 0, %s118
      %s138 = sphi 0, %s140
      %s141 = sphi 0, %s138
      %s142 = sphi 0, %s141
      %s158 = sphi 0, %s142
    $region4: #{tpu_custom_call.1} parent=1 // loop_header_branch
      %21 = sbr.rel (%p19) target = $region8
    $region5: #{tpu_custom_call.1} parent=1 // loop_body
      %s23 = ssub.s32 %s18, 1
      %s24 = ssub.s32 %s18, 2
      %s25 = sadd.s32 %s18, 1
      %s26 = ssub.s32 %s18, %s25
      %p27 = scmp.eq.s32.totalorder %s26, 0
      %s29 = sadd.s32 %s28, 1
      %s30 = scalar_select %p27, %s28, %s29
      %p33 = pneg %p27
      %p34 = scmp.eq.s32.totalorder %s18, 1
      %p35 = por %p33, %p34
      %p36 = scmp.ne.s32.totalorder %s28, %s31
      %p37 = scmp.eq.s32.totalorder %s18, 0
      %p38 = por %p36, %p37
      %p39 = scmp.ne.s32.totalorder %s28, %s31
      %p40 = scmp.eq.s32.totalorder %s23, 1
      %p41 = por %p39, %p40
      %p42 = scmp.ne.s32.totalorder %s31, %s32
      %p43 = scmp.eq.s32.totalorder %s23, 0
      %p44 = por %p42, %p43
      %p45 = scmp.ne.s32.totalorder %s31, %s32
      %p46 = scmp.eq.s32.totalorder %s24, 1
      %p47 = por %p45, %p46
      %p49 = scmp.ne.s32.totalorder %s32, %s48
      %p50 = scmp.eq.s32.totalorder %s24, 0
      %p51 = por %p49, %p50
      %s53 = sadd.s32 %s52, 1
      %p56 = scmp.eq.s32.totalorder %s18, 1
      %p57 = scmp.ne.s32.totalorder %s52, %s54
      %p58 = scmp.eq.s32.totalorder %s18, 0
      %p59 = por %p57, %p58
      %p60 = scmp.ne.s32.totalorder %s52, %s54
      %p61 = scmp.eq.s32.totalorder %s23, 1
      %p62 = por %p60, %p61
      %p63 = scmp.ne.s32.totalorder %s54, %s55
      %p64 = scmp.eq.s32.totalorder %s23, 0
      %p65 = por %p63, %p64
      %p66 = scmp.ne.s32.totalorder %s54, %s55
      %p67 = scmp.eq.s32.totalorder %s24, 1
      %p68 = por %p66, %p67
      %p70 = scmp.ne.s32.totalorder %s55, %s69
      %p71 = scmp.eq.s32.totalorder %s24, 0
      %p72 = por %p70, %p71
      %s74 = sadd.s32 %s73, 1
      %p77 = scmp.eq.s32.totalorder %s18, 1
      %p78 = scmp.ne.s32.totalorder %s73, %s75
      %p79 = scmp.eq.s32.totalorder %s18, 0
      %p80 = por %p78, %p79
      %p81 = scmp.ne.s32.totalorder %s73, %s75
      %p82 = scmp.eq.s32.totalorder %s23, 1
      %p83 = por %p81, %p82
      %p84 = scmp.ne.s32.totalorder %s75, %s76
      %p85 = scmp.eq.s32.totalorder %s23, 0
      %p86 = por %p84, %p85
      %p87 = scmp.ne.s32.totalorder %s75, %s76
      %p88 = scmp.eq.s32.totalorder %s24, 1
      %p89 = por %p87, %p88
      %p91 = scmp.ne.s32.totalorder %s76, %s90
      %p92 = scmp.eq.s32.totalorder %s24, 0
      %p93 = por %p91, %p92
      %s95 = sadd.s32 %s94, 1
      %p98 = scmp.eq.s32.totalorder %s18, 1
      %p99 = scmp.ne.s32.totalorder %s94, %s96
      %p100 = scmp.eq.s32.totalorder %s18, 0
      %p101 = por %p99, %p100
      %p102 = scmp.ne.s32.totalorder %s94, %s96
      %p103 = scmp.eq.s32.totalorder %s23, 1
      %p104 = por %p102, %p103
      %p105 = scmp.ne.s32.totalorder %s96, %s97
      %p106 = scmp.eq.s32.totalorder %s23, 0
      %p107 = por %p105, %p106
      %p108 = scmp.ne.s32.totalorder %s96, %s97
      %p109 = scmp.eq.s32.totalorder %s24, 1
      %p110 = por %p108, %p109
      %p112 = scmp.ne.s32.totalorder %s97, %s111
      %p113 = scmp.eq.s32.totalorder %s24, 0
      %p114 = por %p112, %p113
      %s116 = sadd.s32 %s115, 1
      %p119 = scmp.eq.s32.totalorder %s18, 1
      %p120 = scmp.ne.s32.totalorder %s115, %s117
      %p121 = scmp.eq.s32.totalorder %s18, 0
      %p122 = por %p120, %p121
      %p123 = scmp.ne.s32.totalorder %s115, %s117
      %p124 = scmp.eq.s32.totalorder %s23, 1
      %p125 = por %p123, %p124
      %p126 = scmp.ne.s32.totalorder %s117, %s118
      %p127 = scmp.eq.s32.totalorder %s23, 0
      %p128 = por %p126, %p127
      %p129 = scmp.ne.s32.totalorder %s117, %s118
      %p130 = scmp.eq.s32.totalorder %s24, 1
      %p131 = por %p129, %p130
      %p133 = scmp.ne.s32.totalorder %s118, %s132
      %p134 = scmp.eq.s32.totalorder %s24, 0
      %p135 = por %p133, %p134
      %s136 = ssub.s32 %s18, %s25
      %p137 = scmp.eq.s32.totalorder %s136, 0
      %s139 = sadd.s32 %s138, 1
      %s140 = scalar_select %p137, %s138, %s139
      %p143 = pneg %p137
      %p144 = scmp.eq.s32.totalorder %s18, 1
      %p145 = por %p143, %p144
      %p146 = scmp.ne.s32.totalorder %s138, %s141
      %p147 = scmp.eq.s32.totalorder %s18, 0
      %p148 = por %p146, %p147
      %p149 = scmp.ne.s32.totalorder %s138, %s141
      %p150 = scmp.eq.s32.totalorder %s23, 1
      %p151 = por %p149, %p150
      %p152 = scmp.ne.s32.totalorder %s141, %s142
      %p153 = scmp.eq.s32.totalorder %s23, 0
      %p154 = por %p152, %p153
      %p155 = scmp.ne.s32.totalorder %s141, %s142
      %p156 = scmp.eq.s32.totalorder %s24, 1
      %p157 = por %p155, %p156
      %p159 = scmp.ne.s32.totalorder %s142, %s158
      %p160 = scmp.eq.s32.totalorder %s24, 0
      %p161 = por %p159, %p160
      %p162 = scmp.le.s32.totalorder 1, %s18
      %p163 = scmp.lt.s32.totalorder %s18, 3
      %p164 = pnand %p162, %p163
      %p165 = pneg %p164
      // Predicated region
      $region9: #{tpu_custom_call.1} parent=5 // pred_check
        _
      $region10: #{tpu_custom_call.1} parent=5 // pred_check_branch
        %167 = sbr.rel (%p164) target = $region12
      $region11: #{tpu_custom_call.1} parent=5 // pred_region
        %s168 = ssub.s32 %s18, 1
        // Predicated region
        $region13: #{tpu_custom_call.1} parent=11 // pred_check
          %p169 = pneg %p65
        $region14: #{tpu_custom_call.1} parent=11 // pred_check_branch
          %171 = sbr.rel (%p169) target = $region16
        $region15: #{tpu_custom_call.1} parent=11 // pred_region
          _
        $region16: #{tpu_custom_call.1} parent=11 // pred_fallthru
          _
        // Predicated region
        $region17: #{tpu_custom_call.1} parent=11 // pred_check
          %p172 = pneg %p86
        $region18: #{tpu_custom_call.1} parent=11 // pred_check_branch
          %174 = sbr.rel (%p172) target = $region20
        $region19: #{tpu_custom_call.1} parent=11 // pred_region
          _
        $region20: #{tpu_custom_call.1} parent=11 // pred_fallthru
          _
        // Predicated region
        $region21: #{tpu_custom_call.1} parent=11 // pred_check
          %p175 = pneg %p107
        $region22: #{tpu_custom_call.1} parent=11 // pred_check_branch
          %177 = sbr.rel (%p175) target = $region24
        $region23: #{tpu_custom_call.1} parent=11 // pred_region
          %s179 = ssub.s32 1024, 1024
          %180 = vsyncadd [#allocation6], %s179
          %s181 = sshll.u32 [#allocation5], 4
          %s182 = int_to_ptr.vmem [resolvable:$true] %s181
          %187 = dma.hbm_to_vmem [thread:$0]  %s3, 1024, %s182, [#allocation6], 64, 64, 4
        $region24: #{tpu_custom_call.1} parent=11 // pred_fallthru
          _
        // Predicated region
        $region25: #{tpu_custom_call.1} parent=11 // pred_check
          %p188 = pneg %p128
        $region26: #{tpu_custom_call.1} parent=11 // pred_check_branch
          %190 = sbr.rel (%p188) target = $region28
        $region27: #{tpu_custom_call.1} parent=11 // pred_region
          _
        $region28: #{tpu_custom_call.1} parent=11 // pred_fallthru
          _
      $region12: #{tpu_custom_call.1} parent=5 // pred_fallthru
        _
      %p191 = scmp.lt.s32.totalorder %s18, 2
      // Predicated region
      $region29: #{tpu_custom_call.1} parent=5 // pred_check
        %p192 = pneg %p191
      $region30: #{tpu_custom_call.1} parent=5 // pred_check_branch
        %194 = sbr.rel (%p192) target = $region32
      $region31: #{tpu_custom_call.1} parent=5 // pred_region
        // Predicated region
        $region33: #{tpu_custom_call.1} parent=31 // pred_check
          %p195 = pneg %p38
        $region34: #{tpu_custom_call.1} parent=31 // pred_check_branch
          %197 = sbr.rel (%p195) target = $region36
        $region35: #{tpu_custom_call.1} parent=31 // pred_region
          %s198 = sand.u32 %s28, 1
          %s199 = scalar_lea.sflag [#allocation3], %s198
          %s200 = sand.u32 %s28, 1
          %s201 = smul.addr %s200, 8
          %s202 = scalar_lea.vmem [#allocation2], %s201
          %s204 = ssub.s32 128, 128
          %205 = vsyncadd %s199, %s204
          %s206 = smul.addr %s18, 128
          %s207 = scalar_lea.hbm %s0, %s206
          %s209 = sshll.u32 %s202, 4
          %s210 = int_to_ptr.vmem [resolvable:$true] %s209
          %212 = dma.hbm_to_vmem [thread:$0]  %s207, 128, %s210, %s199
        $region36: #{tpu_custom_call.1} parent=31 // pred_fallthru
          _
      $region32: #{tpu_custom_call.1} parent=5 // pred_fallthru
        _
      %p213 = scmp.le.s32.totalorder 1, %s18
      %p214 = scmp.lt.s32.totalorder %s18, 3
      %p215 = pnand %p213, %p214
      %p216 = pneg %p215
      // Predicated region
      $region37: #{tpu_custom_call.1} parent=5 // pred_check
        _
      $region38: #{tpu_custom_call.1} parent=5 // pred_check_branch
        %218 = sbr.rel (%p215) target = $region40
      $region39: #{tpu_custom_call.1} parent=5 // pred_region
        %s219 = ssub.s32 %s18, 1
        %s220 = sand.u32 %s31, 1
        %s221 = scalar_lea.sflag [#allocation3], %s220
        %s222 = sand.u32 %s31, 1
        %s223 = smul.addr %s222, 8
        %s224 = scalar_lea.vmem [#allocation2], %s223
        // Predicated region
        $region41: #{tpu_custom_call.1} parent=39 // pred_check
          %p225 = pneg %p44
        $region42: #{tpu_custom_call.1} parent=39 // pred_check_branch
          %227 = sbr.rel (%p225) target = $region44
        $region43: #{tpu_custom_call.1} parent=39 // pred_region
          %228 = dma.done %s221, 128
        $region44: #{tpu_custom_call.1} parent=39 // pred_fallthru
          _
        // Predicated region
        $region45: #{tpu_custom_call.1} parent=39 // pred_check
          %p229 = pneg %p107
        $region46: #{tpu_custom_call.1} parent=39 // pred_check_branch
          %231 = sbr.rel (%p229) target = $region48
        $region47: #{tpu_custom_call.1} parent=39 // pred_region
          %232 = dma.done [#allocation6], 1024
        $region48: #{tpu_custom_call.1} parent=39 // pred_fallthru
          _
        %s233 = sand.u32 %s31, 1
        %s234 = scalar_lea.sflag [#allocation3], %s233
        %s235 = sand.u32 %s31, 1
        %s236 = smul.addr %s235, 8
        %s237 = scalar_lea.vmem [#allocation2], %s236
        %p238 = pneg %p44
        %p239 = pneg %p41
        %p240 = pneg %p65
        %p241 = pneg %p62
        %p242 = pneg %p86
        %p243 = pneg %p83
        %p244 = pneg %p107
        %p245 = pneg %p104
        %p246 = pneg %p128
        %p247 = pneg %p125
        %p248 = pneg %p154
        %p249 = pneg %p151
        %s250 = sand.u32 %s141, 1
        %s251 = scalar_lea.sflag [#allocation4], %s250
        %s252 = sand.u32 %s141, 1
        %s253 = smul.addr %s252, 8
        %s254 = scalar_lea.vmem [#allocation7], %s253
        %v256 = vld [vmem:[%s224] sm:$0xff]
        %v257 = vld [vmem:[%s1] sm:$0x1]
        %v258 = vld [vmem:[%s2] sm:$0x1]
        %259 = vadd.xlane.f32.xlu0 %v256
        %v260 = vpop.xlane.xlu0 %259
        %v261 = vmul.f32 %v260, 0.03125
        %v262 = vsub.f32 %v256, %v261
        %v263 = vlaneseq
        %v264 = vand.u32 %v263, 127
        %vm265 = vcmp.lt.s32.totalorder %v264, 32
        %v266 = vsel %vm265, %v262, 0.0
        %v267 = vmul.f32 %v266, %v266
        %268 = vadd.xlane.f32.xlu0 %v267
        %v269 = vpop.xlane.xlu0 %268
        %v270 = vmul.f32 %v269, 0.032258064
        %v271 = vrsqrt.pop %v270
        %v272 = vmul.f32 %v270, %v271
        %vm273 = vcmp.eq.f32.partialorder %v270, inf
        %v274 = vsel %vm273, %v270, %v272
        %vm275 = vcmp.eq.f32.partialorder %v270, 0.0
        %v276 = vand.u32 %v270, 2147483648
        %v277 = vsel %vm275, %v276, %v274
        %v278 = vadd.f32 %v277, 1e-06
        %v279 = vrcp.pop %v278
        %v281 = vlaneseq
        %v282 = vshrl.u32 %v281, 7
        %v283 = vsub.s32 0, %v282
        %v284 = vrot.slane %v257, %v283
        %v286 = vmul.f32 %v284, %v266
        %v287 = vmul.f32 %v286, %v279
        %v289 = vlaneseq
        %v290 = vshrl.u32 %v289, 7
        %v291 = vsub.s32 0, %v290
        %v292 = vrot.slane %v258, %v291
        %v294 = vadd.f32 %v287, %v292
        %v295 = vpack.c.bf16 %v294, %v294
        %v296 = vld [vmem:[#allocation5] sm:$0xf]
        %v297 = vld [vmem:[#allocation5 + $0x4] sm:$0xf]
        %v298 = vld [vmem:[#allocation5 + $0x8] sm:$0xf]
        %v299 = vld [vmem:[#allocation5 + $0xc] sm:$0xf]
        %v300 = vld [vmem:[#allocation5 + $0x10] sm:$0xf]
        %v301 = vld [vmem:[#allocation5 + $0x14] sm:$0xf]
        %v302 = vld [vmem:[#allocation5 + $0x18] sm:$0xf]
        %v303 = vld [vmem:[#allocation5 + $0x1c] sm:$0xf]
        %v304 = vld [vmem:[#allocation5 + $0x20] sm:$0xf]
        %v305 = vld [vmem:[#allocation5 + $0x24] sm:$0xf]
        %v306 = vld [vmem:[#allocation5 + $0x28] sm:$0xf]
        %v307 = vld [vmem:[#allocation5 + $0x2c] sm:$0xf]
        %v308 = vld [vmem:[#allocation5 + $0x30] sm:$0xf]
        %v309 = vld [vmem:[#allocation5 + $0x34] sm:$0xf]
        %v310 = vld [vmem:[#allocation5 + $0x38] sm:$0xf]
        %v311 = vld [vmem:[#allocation5 + $0x3c] sm:$0xf]
        %v328 = vunpack.c.l.b16 %v296
        %v329 = vunpack.c.l.b16 %v297
        %v330 = vunpack.c.l.b16 %v298
        %v331 = vunpack.c.l.b16 %v299
        %v332 = vunpack.c.l.b16 %v300
        %v333 = vunpack.c.l.b16 %v301
        %v334 = vunpack.c.l.b16 %v302
        %v335 = vunpack.c.l.b16 %v303
        %v336 = vunpack.c.l.b16 %v304
        %v337 = vunpack.c.l.b16 %v305
        %v338 = vunpack.c.l.b16 %v306
        %v339 = vunpack.c.l.b16 %v307
        %v340 = vunpack.c.l.b16 %v308
        %v341 = vunpack.c.l.b16 %v309
        %v342 = vunpack.c.l.b16 %v310
        %v343 = vunpack.c.l.b16 %v311
        %v344 = vpack.c.b16 %v329, %v328
        %v345 = vpack.c.b16 %v331, %v330
        %v346 = vpack.c.b16 %v333, %v332
        %v347 = vpack.c.b16 %v335, %v334
        %v348 = vpack.c.b16 %v337, %v336
        %v349 = vpack.c.b16 %v339, %v338
        %v350 = vpack.c.b16 %v341, %v340
        %v351 = vpack.c.b16 %v343, %v342
        %360 = vmatprep.subr.bf16.mxu0 0
        %361 = vmatpush1.bf16.msra.mxu0 %v344
        %362 = vmatprep.subr.bf16.mxu0 0
        %363 = vmatpush1.bf16.msra.mxu0 %v345
        %364 = vmatprep.subr.bf16.mxu0 0
        %365 = vmatpush1.bf16.msra.mxu0 %v346
        %366 = vmatprep.subr.bf16.mxu0 0
        %367 = vmatpush1.bf16.msra.mxu0 %v347
        %368 = vmatprep.subr.bf16.mxu0 0
        %369 = vmatpush1.bf16.msra.mxu0 %v348
        %370 = vmatprep.subr.bf16.mxu0 0
        %371 = vmatpush1.bf16.msra.mxu0 %v349
        %372 = vmatprep.subr.bf16.mxu0 0
        %373 = vmatpush1.bf16.msra.mxu0 %v350
        %374 = vmatprep.subr.bf16.mxu0 0
        %375 = vmatpush1.bf16.msra.mxu0 %v351
        %376 = vmatprep.subr.bf16.mxu0 0
        %377 = vmatpush1.bf16.msra.mxu0 0
        %378 = vmatprep.subr.bf16.mxu0 0
        %379 = vmatpush1.bf16.msra.mxu0 0
        %380 = vmatprep.subr.bf16.mxu0 0
        %381 = vmatpush1.bf16.msra.mxu0 0
        %382 = vmatprep.subr.bf16.mxu0 0
        %383 = vmatpush1.bf16.msra.mxu0 0
        %384 = vmatprep.subr.bf16.mxu0 0
        %385 = vmatpush1.bf16.msra.mxu0 0
        %386 = vmatprep.subr.bf16.mxu0 0
        %387 = vmatpush1.bf16.msra.mxu0 0
        %388 = vmatprep.subr.bf16.mxu0 0
        %389 = vmatpush1.bf16.msra.mxu0 0
        %390 = vmatprep.subr.bf16.mxu0 0
        %391 = vmatpush1.bf16.msra.mxu0 0
        %392 = vmatprep.mubr.bf16.mxu0 0
        %393 = vmatmul.mubr.bf16.gmra.mrb[0].mxu0 %v295
        %v394 = vpop.f32.mrb[0].mxu0
        %v395 = vadd.f32 0.0, %v394
        %v396 = vpop.f32.mrb[0].mxu0
        %v397 = vpop.f32.mrb[0].mxu0
        %v398 = vpop.f32.mrb[0].mxu0
        %399 = vdwg.mxu0
        %v400 = vld [vmem:[%s4] sm:$0x1]
        %v402 = vlaneseq
        %v403 = vshrl.u32 %v402, 7
        %v404 = vsub.s32 0, %v403
        %v405 = vrot.slane %v400, %v404
        %v407 = vadd.f32 %v256, %v405
        %v408 = vadd.f32 %v407, %v395
        %409 = vst [vmem:[%s254] sm:$0xff] %v408
        %s410 = sand.u32 %s141, 1
        %s411 = scalar_lea.sflag [#allocation4], %s410
        %s412 = sand.u32 %s141, 1
        %s413 = smul.addr %s412, 8
        %s414 = scalar_lea.vmem [#allocation7], %s413
        // Predicated region
        $region49: #{tpu_custom_call.1} parent=39 // pred_check
          %p415 = pneg %p151
        $region50: #{tpu_custom_call.1} parent=39 // pred_check_branch
          %417 = sbr.rel (%p415) target = $region52
        $region51: #{tpu_custom_call.1} parent=39 // pred_region
          %s419 = ssub.s32 128, 128
          %420 = vsyncadd %s411, %s419
          %s421 = smul.addr %s23, 128
          %s422 = scalar_lea.hbm %s5, %s421
          %s424 = sshll.u32 %s414, 4
          %s425 = int_to_ptr.vmem [resolvable:$true] %s424
          %427 = dma.vmem_to_hbm [thread:$0]  %s425, 128, %s422, %s411
        $region52: #{tpu_custom_call.1} parent=39 // pred_fallthru
          _
      $region40: #{tpu_custom_call.1} parent=5 // pred_fallthru
        _
      %p428 = scmp.le.s32.totalorder 2, %s18
      // Predicated region
      $region53: #{tpu_custom_call.1} parent=5 // pred_check
        %p429 = pneg %p428
      $region54: #{tpu_custom_call.1} parent=5 // pred_check_branch
        %431 = sbr.rel (%p429) target = $region56
      $region55: #{tpu_custom_call.1} parent=5 // pred_region
        %s432 = ssub.s32 %s18, 2
        // Predicated region
        $region57: #{tpu_custom_call.1} parent=55 // pred_check
          %p433 = pneg %p157
        $region58: #{tpu_custom_call.1} parent=55 // pred_check_branch
          %435 = sbr.rel (%p433) target = $region60
        $region59: #{tpu_custom_call.1} parent=55 // pred_region
          %s436 = sand.u32 %s142, 1
          %s437 = scalar_lea.sflag [#allocation4], %s436
          %s438 = sand.u32 %s142, 1
          %s439 = smul.addr %s438, 8
          %s440 = scalar_lea.vmem [#allocation7], %s439
          %441 = dma.done %s437, 128
        $region60: #{tpu_custom_call.1} parent=55 // pred_fallthru
          _
      $region56: #{tpu_custom_call.1} parent=5 // pred_fallthru
        _
    $region6: #{tpu_custom_call.1} parent=1 // loop_footer
      %s22 = sadd.s32 1, %s18
    $region7: #{tpu_custom_call.1} parent=1 // loop_footer_branch
      %17 = sbr.rel target = $region3
    $region8: #{tpu_custom_call.1} parent=1 // loop_exit
      _
    %442 = vsyncpa [#allocation3], 1
    %s443 = scalar_lea.sflag [#allocation3], 1
    %444 = vsyncpa %s443, 1
    %445 = vsyncpa [#allocation6], 1
    %446 = vsyncpa [#allocation4], 1
    %s447 = scalar_lea.sflag [#allocation4], 1
    %448 = vsyncpa %s447, 1

</llo_original>
